<compile_context>
chip_gen: v7x
topology: tpu7x:2x2x1
jax: 0.10.0
libtpu: 0.0.40
codegen_flags: <defaults>
</compile_context>

<pallas_src>
import functools

import jax
import jax.numpy as jnp
from jax.experimental import pallas as pl
from jax.experimental.pallas import tpu as pltpu

_TARGET_BLOCK_BYTES = 2 * 1024 * 1024   # aim for ~1-4 MiB per input block


def _round_up(x, m):
    return ((x + m - 1) // m) * m


def _tpu_info():
    try:
        return pltpu.get_tpu_info()
    except Exception:
        return None


def _vmem_capacity_bytes():
    info = _tpu_info()
    if info is not None:
        v = getattr(info, "vmem_capacity_bytes", None)
        if v:
            return int(v)
    return 64 * 1024 * 1024   # conservative fallback (v7x-sized)


def _num_tensorcores():
    info = _tpu_info()
    if info is not None:
        for attr in ("num_cores", "num_tensorcores", "tensor_cores_per_chip",
                     "cores_per_chip"):
            v = getattr(info, attr, None)
            if isinstance(v, int) and v > 0:
                return max(1, min(2, v))
    try:
        kind = jax.devices()[0].device_kind.lower()
        if "v7" in kind or "7x" in kind:
            return 2
    except Exception:
        pass
    return 1


def _choose_blocking(n, c, hw, itemsize, budget_bytes, num_tc):
    """Pick (nb, tile_hw).

    tile_hw is either a multiple of 128 (partial final block handled by
    Pallas) or exactly hw (whole spatial extent in one tile, with batch rows
    folded in to reach the byte target)."""
    col_bytes = max(1, c * itemsize)
    # Keep each per-channel strided DMA row >= ~1 KiB (v5e sensitivity).
    min_tile = max(128, _round_up(max(1, 1024 // itemsize), 128))
    by_target = max(128, (_TARGET_BLOCK_BYTES // col_bytes) // 128 * 128)
    by_vmem = max(128, (budget_bytes // (4 * col_bytes)) // 128 * 128)
    tile = min(max(by_target, min_tile), by_vmem)

    hw128 = _round_up(hw, 128)
    if tile >= hw128:
        # The whole spatial extent fits in one block.
        if n == 1 and num_tc >= 2 and hw >= num_tc * min_tile:
            # Dual-TensorCore chip (v7x): split spatially so both cores work.
            return 1, max(min_tile, _round_up(pl.cdiv(hw, num_tc), 128))
        # Fold batch rows into the block to reach the byte target.
        slab_bytes = c * hw * itemsize
        nb = max(1, min(n,
                        _TARGET_BLOCK_BYTES // max(1, slab_bytes),
                        budget_bytes // max(1, 4 * slab_bytes)))
        if num_tc >= 2 and nb > 1 and pl.cdiv(n, nb) < num_tc:
            nb = max(1, pl.cdiv(n, num_tc))
        return nb, hw
    # Several spatial tiles per batch row.
    if n == 1 and num_tc >= 2 and pl.cdiv(hw, tile) < num_tc:
        tile = max(min_tile, _round_up(pl.cdiv(hw, num_tc), 128))
    return 1, tile


def _layernorm_cf_kernel(x_ref, w_ref, b_ref, o_ref, *, eps, inv_c):
    # x_ref / o_ref: (NB, C, T); w_ref / b_ref: (C, 1) -> broadcast over NB, T.
    x = x_ref[...].astype(jnp.float32)
    mean = jnp.sum(x, axis=1, keepdims=True) * inv_c          # (NB, 1, T)
    d = x - mean
    var = jnp.sum(d * d, axis=1, keepdims=True) * inv_c       # (NB, 1, T)
    inv = jax.lax.rsqrt(var + eps)
    w = w_ref[...].astype(jnp.float32)                        # (C, 1)
    b = b_ref[...].astype(jnp.float32)
    o_ref[...] = (w * (d * inv) + b).astype(o_ref.dtype)


def layernorm_channels_first(x, weight, bias, eps=1e-6, tile_hw=None):
    """x: (N, C, H, W); weight, bias: (C,). Normalizes over C per position."""
    n, c, h, w = x.shape
    hw = h * w
    itemsize = jnp.dtype(x.dtype).itemsize

    cap = _vmem_capacity_bytes()
    num_tc = _num_tensorcores()
    # ~24 MiB budget on 64-MiB-VMEM chips (v7x), ~48 MiB on 128-MiB chips.
    budget = max(8 << 20, min(cap // 2 - (8 << 20), 48 << 20))

    if tile_hw is None:
        nb, tile_hw = _choose_blocking(n, c, hw, itemsize, budget, num_tc)
    else:
        # Explicit override: keep it lane-aligned and within the VMEM budget.
        nb = 1
        tile_hw = max(128, (int(tile_hw) // 128) * 128)
        tile_hw = min(tile_hw,
                      max(128, (budget // max(1, 4 * c * itemsize)) // 128 * 128),
                      _round_up(hw, 128))

    x3 = x.reshape(n, c, hw)                    # contiguous view, no HBM pass
    w2 = weight.reshape(c, 1).astype(jnp.float32)
    b2 = bias.reshape(c, 1).astype(jnp.float32)

    grid = (pl.cdiv(n, nb), pl.cdiv(hw, tile_hw))

    # Actual footprint: 2 buffers x (in + out) blocks + w/b blocks + headroom.
    block_bytes = nb * c * tile_hw * itemsize
    footprint = 4 * block_bytes + 16 * c + (2 << 20)
    vmem_limit = int(min(max(footprint, 8 << 20), cap - (8 << 20)))

    kernel = functools.partial(_layernorm_cf_kernel,
                               eps=float(eps), inv_c=1.0 / float(c))

    out = pl.pallas_call(
        kernel,
        out_shape=jax.ShapeDtypeStruct((n, c, hw), x.dtype),
        grid_spec=pltpu.PrefetchScalarGridSpec(
            num_scalar_prefetch=0,
            grid=grid,
            in_specs=[
                pl.BlockSpec((nb, c, tile_hw), lambda i, j: (i, 0, j)),
                pl.BlockSpec((c, 1), lambda i, j: (0, 0)),
                pl.BlockSpec((c, 1), lambda i, j: (0, 0)),
            ],
            out_specs=pl.BlockSpec((nb, c, tile_hw), lambda i, j: (i, 0, j)),
        ),
        compiler_params=pltpu.CompilerParams(
            dimension_semantics=("parallel", "parallel"),
            vmem_limit_bytes=vmem_limit,
        ),
    )(x3, w2, b2)

    return out.reshape(n, c, h, w)


def layernorm_ref(x, weight, bias, eps=1e-6):
    mean = jnp.mean(x, axis=1, keepdims=True)
    var = jnp.mean((x - mean) ** 2, axis=1, keepdims=True)
    xn = (x - mean) / jnp.sqrt(var + eps)
    return weight[None, :, None, None] * xn + bias[None, :, None, None]


if __name__ == "__main__":
    key = jax.random.PRNGKey(0)

    def run_case(key, shape, tile_hw=None):
        k_x, k_w, k_b = jax.random.split(key, 3)
        n, c, h, w = shape
        x = jax.random.normal(k_x, shape, dtype=jnp.float32)
        # Module init is ones/zeros; perturb to exercise the affine path.
        weight = jnp.ones((c,), jnp.float32) + 0.1 * jax.random.normal(k_w, (c,), jnp.float32)
        bias = 0.1 * jax.random.normal(k_b, (c,), jnp.float32)
        out = jax.block_until_ready(
            layernorm_channels_first(x, weight, bias, eps=1e-6, tile_hw=tile_hw))
        ref = layernorm_ref(x, weight, bias, eps=1e-6)
        assert out.shape == shape
        assert jnp.allclose(out, ref, atol=1e-5, rtol=1e-5), f"mismatch for {shape}"

    keys = jax.random.split(key, 4)
    # Base case (batch-folded block path).
    run_case(keys[0], (2, 4, 16, 16))
    # Non-multiple-of-128 spatial extent, N == 1 (full-dim tile path).
    run_case(keys[1], (1, 4, 7, 9))
    # Batch folding with a potentially non-dividing batch block.
    run_case(keys[2], (3, 8, 9, 14))
    # Explicit small tile: exercises the partial final spatial block
    # (OOB-read columns, clipped writeback).
    run_case(keys[3], (1, 4, 16, 20), tile_hw=128)

    print("KERNEL_OK")
</pallas_src>

<mosaic_0001>
module attributes {stable_mosaic.version = 11 : i64} {
  func.func @_layernorm_cf_kernel(%arg0: i32, %arg1: i32, %arg2: memref<2x4x256xf32, #tpu.memory_space<vmem>>, %arg3: memref<4x1xf32, #tpu.memory_space<vmem>>, %arg4: memref<4x1xf32, #tpu.memory_space<vmem>>, %arg5: memref<2x4x256xf32, #tpu.memory_space<vmem>>) attributes {dimension_semantics = [#tpu.dimension_semantics<parallel>, #tpu.dimension_semantics<parallel>], iteration_bounds = array<i64: 1, 1>, scalar_prefetch = 0 : i64, scratch_operands = 0 : i64, tpu.core_type = #tpu.core_type<tc>, window_params = [{transform_indices = @transform_0, window_bounds = array<i64: 2, 4, 256>}, {pipeline_mode = #tpu.pipeline_mode<synchronous>, transform_indices = @transform_1, window_bounds = array<i64: 4, 1>}, {pipeline_mode = #tpu.pipeline_mode<synchronous>, transform_indices = @transform_2, window_bounds = array<i64: 4, 1>}, {transform_indices = @transform_3, window_bounds = array<i64: 2, 4, 256>}]} {
    %c0 = arith.constant 0 : index
    %c0_0 = arith.constant 0 : index
    %c0_1 = arith.constant 0 : index
    %0 = vector.load %arg2[%c0, %c0_0, %c0_1] : memref<2x4x256xf32, #tpu.memory_space<vmem>>, vector<2x4x256xf32>
    %cst = arith.constant dense<0.000000e+00> : vector<2x256xf32>
    %1 = vector.multi_reduction <add>, %0, %cst [1] : vector<2x4x256xf32> to vector<2x256xf32>
    %2 = vector.shape_cast %1 : vector<2x256xf32> to vector<2x1x256xf32>
    %cst_2 = arith.constant 2.500000e-01 : f32
    %3 = vector.broadcast %cst_2 : f32 to vector<2x1x256xf32>
    %4 = arith.mulf %2, %3 : vector<2x1x256xf32>
    %5 = vector.broadcast %4 : vector<2x1x256xf32> to vector<2x4x256xf32>
    %6 = arith.subf %0, %5 : vector<2x4x256xf32>
    %7 = arith.mulf %6, %6 : vector<2x4x256xf32>
    %cst_3 = arith.constant dense<0.000000e+00> : vector<2x256xf32>
    %8 = vector.multi_reduction <add>, %7, %cst_3 [1] : vector<2x4x256xf32> to vector<2x256xf32>
    %9 = vector.shape_cast %8 : vector<2x256xf32> to vector<2x1x256xf32>
    %cst_4 = arith.constant 2.500000e-01 : f32
    %10 = vector.broadcast %cst_4 : f32 to vector<2x1x256xf32>
    %11 = arith.mulf %9, %10 : vector<2x1x256xf32>
    %cst_5 = arith.constant 9.99999997E-7 : f32
    %12 = vector.broadcast %cst_5 : f32 to vector<2x1x256xf32>
    %13 = arith.addf %11, %12 : vector<2x1x256xf32>
    %14 = math.rsqrt %13 : vector<2x1x256xf32>
    %c0_6 = arith.constant 0 : index
    %c0_7 = arith.constant 0 : index
    %15 = vector.load %arg3[%c0_6, %c0_7] : memref<4x1xf32, #tpu.memory_space<vmem>>, vector<4x1xf32>
    %c0_8 = arith.constant 0 : index
    %c0_9 = arith.constant 0 : index
    %16 = vector.load %arg4[%c0_8, %c0_9] : memref<4x1xf32, #tpu.memory_space<vmem>>, vector<4x1xf32>
    %17 = vector.broadcast %14 : vector<2x1x256xf32> to vector<2x4x256xf32>
    %18 = arith.mulf %6, %17 : vector<2x4x256xf32>
    %19 = vector.shape_cast %15 : vector<4x1xf32> to vector<1x4x1xf32>
    %20 = vector.broadcast %19 : vector<1x4x1xf32> to vector<2x4x256xf32>
    %21 = arith.mulf %20, %18 : vector<2x4x256xf32>
    %22 = vector.shape_cast %16 : vector<4x1xf32> to vector<1x4x1xf32>
    %23 = vector.broadcast %22 : vector<1x4x1xf32> to vector<2x4x256xf32>
    %24 = arith.addf %21, %23 : vector<2x4x256xf32>
    %c0_10 = arith.constant 0 : index
    %c0_11 = arith.constant 0 : index
    %c0_12 = arith.constant 0 : index
    %25 = vector.load %arg5[%c0_10, %c0_11, %c0_12] : memref<2x4x256xf32, #tpu.memory_space<vmem>>, vector<2x4x256xf32>
    tpu.vector_store %arg5[%c0_10, %c0_11, %c0_12], %24 {strides = array<i32>} : memref<2x4x256xf32, #tpu.memory_space<vmem>>, vector<2x4x256xf32>,
    return
  }
  func.func @transform_0(%arg0: i32, %arg1: i32) -> (i32, i32, i32) {
    %c0_i32 = arith.constant 0 : i32
    %c0_i32_0 = arith.constant 0 : i32
    return %arg0, %c0_i32, %arg1 : i32, i32, i32
  }
  func.func @transform_1(%arg0: i32, %arg1: i32) -> (i32, i32) {
    %c0_i32 = arith.constant 0 : i32
    %c0_i32_0 = arith.constant 0 : i32
    %c0_i32_1 = arith.constant 0 : i32
    return %c0_i32, %c0_i32_0 : i32, i32
  }
  func.func @transform_2(%arg0: i32, %arg1: i32) -> (i32, i32) {
    %c0_i32 = arith.constant 0 : i32
    %c0_i32_0 = arith.constant 0 : i32
    %c0_i32_1 = arith.constant 0 : i32
    return %c0_i32, %c0_i32_0 : i32, i32
  }
  func.func @transform_3(%arg0: i32, %arg1: i32) -> (i32, i32, i32) {
    %c0_i32 = arith.constant 0 : i32
    %c0_i32_0 = arith.constant 0 : i32
    return %arg0, %c0_i32, %arg1 : i32, i32, i32
  }
}

</mosaic_0001>

<llo_original>
// kernel: tpu_custom_call.1
$region0: #{tpu_custom_call.1}
  #allocation0 [shape = 'u32[]', space=smem, size = 0x4, offset = 0x4, fixed_abs, tag = 'smem constant byte address 0x4 - core index']
  #allocation1 [shape = 'u32[144,128]{1,0:T(1,128)}', space=vmem, size = 0x12000, scoped, tag = 'internal scratch']
  %s0 = inlined_call_operand.hbm [shape: f32[2,4,256], index: 0, kind: input, shape index: {}]
  %s1 = inlined_call_operand.vmem [shape: f32[4,1], index: 1, kind: input, shape index: {}]
  %s2 = inlined_call_operand.vmem [shape: f32[4,1], index: 2, kind: input, shape index: {}]
  %s3 = inlined_call_operand.hbm [shape: f32[2,4,256], index: 3, kind: output, shape index: {}]
  %s4 = sld [smem:[#allocation0]]
  $region26: #{tpu_custom_call.1} parent=0
    _
  %s6 = ssub.s32 1, %s4
  %s7 = scalar_select 0, %s6, %s4
  $region1: #{tpu_custom_call.1} parent=0
    #allocation2 [shape = 'u8[8192]{0}', space=vmem, size = 0x2000, scoped, tag = 'input window, operand 0, single buffered']
    #allocation3 [shape = 's32[1]{0}', space=sflag, size = 0x4, scoped, tag = 'scoped memory for tpu_custom_call.1']
    #allocation4 [shape = 's32[1]{0}', space=sflag, size = 0x4, scoped, tag = 'scoped memory for tpu_custom_call.1']
    #allocation5 [shape = 'u8[8192]{0}', space=vmem, size = 0x2000, scoped, tag = 'output window, operand 0, single buffered']
    %8 = vsyncpa [#allocation3], 0
    %9 = vsyncpa [#allocation4], 0
    // Predicated region
    $region2: #{tpu_custom_call.1} parent=1 // pred_check
      _
    $region3: #{tpu_custom_call.1} parent=1 // pred_check_branch
      %11 = sbr.rel (0) target = $region5
    $region4: #{tpu_custom_call.1} parent=1 // pred_region
      %s13 = ssub.s32 256, 256
      %14 = vsyncadd [#allocation3], %s13
      %s15 = sshll.u32 [#allocation2], 4
      %s16 = int_to_ptr.vmem [resolvable:$true] %s15
      %21 = dma.hbm_to_vmem [thread:$0]  %s0, 256, %s16, [#allocation3], 128, 128, 8
    $region5: #{tpu_custom_call.1} parent=1 // pred_fallthru
      _
    // Predicated region
    $region6: #{tpu_custom_call.1} parent=1 // pred_check
      _
    $region7: #{tpu_custom_call.1} parent=1 // pred_check_branch
      %23 = sbr.rel (0) target = $region9
    $region8: #{tpu_custom_call.1} parent=1 // pred_region
      _
    $region9: #{tpu_custom_call.1} parent=1 // pred_fallthru
      _
    // Predicated region
    $region10: #{tpu_custom_call.1} parent=1 // pred_check
      _
    $region11: #{tpu_custom_call.1} parent=1 // pred_check_branch
      %25 = sbr.rel (0) target = $region13
    $region12: #{tpu_custom_call.1} parent=1 // pred_region
      _
    $region13: #{tpu_custom_call.1} parent=1 // pred_fallthru
      _
    // Predicated region
    $region14: #{tpu_custom_call.1} parent=1 // pred_check
      _
    $region15: #{tpu_custom_call.1} parent=1 // pred_check_branch
      %27 = sbr.rel (0) target = $region17
    $region16: #{tpu_custom_call.1} parent=1 // pred_region
      %28 = dma.done [#allocation3], 256
    $region17: #{tpu_custom_call.1} parent=1 // pred_fallthru
      _
    %v29 = vld [vmem:[#allocation2] sm:$0xff]
    %v30 = vld [vmem:[#allocation2 + $0x8] sm:$0xff]
    %v33 = vcombine.high %v29, %v29
    %v34 = vcombine.high %v30, %v30
    %vm37 = vcmask 1043456
    %v38 = vsel %vm37, %v29, 0.0
    %v39 = vrot.slane %v38, 4
    %v40 = vadd.f32 %v38, %v39
    %v41 = vrot.slane %v40, 2
    %v42 = vadd.f32 %v40, %v41
    %v43 = vrot.slane %v42, 1
    %v44 = vadd.f32 %v42, %v43
    %v45 = vsel %vm37, %v33, 0.0
    %v46 = vrot.slane %v45, 4
    %v47 = vadd.f32 %v45, %v46
    %v48 = vrot.slane %v47, 2
    %v49 = vadd.f32 %v47, %v48
    %v50 = vrot.slane %v49, 1
    %v51 = vadd.f32 %v49, %v50
    %v52 = vsel %vm37, %v30, 0.0
    %v53 = vrot.slane %v52, 4
    %v54 = vadd.f32 %v52, %v53
    %v55 = vrot.slane %v54, 2
    %v56 = vadd.f32 %v54, %v55
    %v57 = vrot.slane %v56, 1
    %v58 = vadd.f32 %v56, %v57
    %v59 = vsel %vm37, %v34, 0.0
    %v60 = vrot.slane %v59, 4
    %v61 = vadd.f32 %v59, %v60
    %v62 = vrot.slane %v61, 2
    %v63 = vadd.f32 %v61, %v62
    %v64 = vrot.slane %v63, 1
    %v65 = vadd.f32 %v63, %v64
    %v66 = vmul.f32 %v44, 0.25
    %v67 = vmul.f32 %v51, 0.25
    %v68 = vmul.f32 %v58, 0.25
    %v69 = vmul.f32 %v65, 0.25
    %v74 = vcombine.low %v66, %v67
    %v75 = vcombine.low %v68, %v69
    %v78 = vsub.f32 %v29, %v74
    %v79 = vsub.f32 %v30, %v75
    %v80 = vmul.f32 %v78, %v78
    %v81 = vmul.f32 %v79, %v79
    %v84 = vcombine.high %v80, %v80
    %v85 = vcombine.high %v81, %v81
    %v88 = vsel %vm37, %v80, 0.0
    %v89 = vrot.slane %v88, 4
    %v90 = vadd.f32 %v88, %v89
    %v91 = vrot.slane %v90, 2
    %v92 = vadd.f32 %v90, %v91
    %v93 = vrot.slane %v92, 1
    %v94 = vadd.f32 %v92, %v93
    %v95 = vsel %vm37, %v84, 0.0
    %v96 = vrot.slane %v95, 4
    %v97 = vadd.f32 %v95, %v96
    %v98 = vrot.slane %v97, 2
    %v99 = vadd.f32 %v97, %v98
    %v100 = vrot.slane %v99, 1
    %v101 = vadd.f32 %v99, %v100
    %v102 = vsel %vm37, %v81, 0.0
    %v103 = vrot.slane %v102, 4
    %v104 = vadd.f32 %v102, %v103
    %v105 = vrot.slane %v104, 2
    %v106 = vadd.f32 %v104, %v105
    %v107 = vrot.slane %v106, 1
    %v108 = vadd.f32 %v106, %v107
    %v109 = vsel %vm37, %v85, 0.0
    %v110 = vrot.slane %v109, 4
    %v111 = vadd.f32 %v109, %v110
    %v112 = vrot.slane %v111, 2
    %v113 = vadd.f32 %v111, %v112
    %v114 = vrot.slane %v113, 1
    %v115 = vadd.f32 %v113, %v114
    %v116 = vmul.f32 %v94, 0.25
    %v117 = vmul.f32 %v101, 0.25
    %v118 = vmul.f32 %v108, 0.25
    %v119 = vmul.f32 %v115, 0.25
    %v120 = vadd.f32 %v116, 1e-06
    %v121 = vadd.f32 %v117, 1e-06
    %v122 = vadd.f32 %v118, 1e-06
    %v123 = vadd.f32 %v119, 1e-06
    %v124 = vrsqrt.pop %v120
    %v125 = vrsqrt.pop %v121
    %v126 = vrsqrt.pop %v122
    %v127 = vrsqrt.pop %v123
    %v128 = vld [vmem:[%s1] sm:$0xf]
    %v129 = vld [vmem:[%s2] sm:$0xf]
    %v134 = vcombine.low %v124, %v125
    %v135 = vcombine.low %v126, %v127
    %v138 = vmul.f32 %v78, %v134
    %v139 = vmul.f32 %v79, %v135
    %141 = vset.pattern.permute.xlu0 0
    %142 = vperm.xlu0 %141, %v128
    %v143 = vpop.permute.xlu0 %142
    %v147 = vcombine.high %v138, %v138
    %v148 = vcombine.high %v139, %v139
    %v151 = vmul.f32 %v143, %v138
    %v152 = vmul.f32 %v143, %v147
    %v153 = vmul.f32 %v143, %v139
    %v154 = vmul.f32 %v143, %v148
    %156 = vset.pattern.permute.xlu0 0
    %157 = vperm.xlu0 %156, %v129
    %v158 = vpop.permute.xlu0 %157
    %v160 = vadd.f32 %v151, %v158
    %v161 = vadd.f32 %v152, %v158
    %v162 = vadd.f32 %v153, %v158
    %v163 = vadd.f32 %v154, %v158
    %v168 = vcombine.low %v160, %v161
    %v169 = vcombine.low %v162, %v163
    %172 = vst [vmem:[#allocation5] sm:$0xff] %v168
    %173 = vst [vmem:[#allocation5 + $0x8] sm:$0xff] %v169
    // Predicated region
    $region18: #{tpu_custom_call.1} parent=1 // pred_check
      _
    $region19: #{tpu_custom_call.1} parent=1 // pred_check_branch
      %175 = sbr.rel (0) target = $region21
    $region20: #{tpu_custom_call.1} parent=1 // pred_region
      %s177 = ssub.s32 256, 256
      %178 = vsyncadd [#allocation4], %s177
      %s179 = sshll.u32 [#allocation5], 4
      %s180 = int_to_ptr.vmem [resolvable:$true] %s179
      %185 = dma.vmem_to_hbm [thread:$0]  %s180, 256, %s3, [#allocation4], 128, 128, 8
    $region21: #{tpu_custom_call.1} parent=1 // pred_fallthru
      _
    // Predicated region
    $region22: #{tpu_custom_call.1} parent=1 // pred_check
      _
    $region23: #{tpu_custom_call.1} parent=1 // pred_check_branch
      %187 = sbr.rel (0) target = $region25
    $region24: #{tpu_custom_call.1} parent=1 // pred_region
      %188 = dma.done [#allocation4], 256
    $region25: #{tpu_custom_call.1} parent=1 // pred_fallthru
      _
    %189 = vsyncpa [#allocation3], 1
    %190 = vsyncpa [#allocation4], 1

</llo_original>
